<compile_context>
chip_gen: v7x
topology: tpu7x:2x2x1
jax: 0.10.0
libtpu: 0.0.40
codegen_flags: <defaults>
</compile_context>

<pallas_src>
import functools

import jax
import jax.numpy as jnp
from jax.experimental import pallas as pl
from jax.experimental.pallas import tpu as pltpu


_LANES = 1024            # lane-dense tile width (multiple of 128)
_MAX_TILE_ROWS = 1024    # 1024 x 1024 f32 = 4 MiB per input tile
_NUM_PARTS = 2           # megacore split; sequential no-op on 1-TC chips


def _ceil_div(a: int, b: int) -> int:
    return -(-a // b)


def _round_up(x: int, m: int) -> int:
    return _ceil_div(x, m) * m


def _image_level_mse_kernel(y_true_ref, y_pred_ref, out_ref, acc_ref,
                            *, tile_rows, width):
    """Grid: (part, step).  `part` is "parallel" (megacore), `step` is the
    sequential reduction axis.

    y_true_ref / y_pred_ref : (tile_rows, width) lane-dense f32 VMEM tiles
    out_ref                 : (1, 8, width) per-part partial-sum output
    acc_ref                 : (8, width)    VMEM vector accumulator
    """
    s = pl.program_id(1)

    @pl.when(s == 0)
    def _init():
        acc_ref[...] = jnp.zeros_like(acc_ref)

    diff = y_true_ref[...] - y_pred_ref[...]        # VPU elementwise
    sq = diff * diff
    # Fold rows onto an (8, width) vreg-aligned accumulator: the reshape keeps
    # the native (8, 128) tiling (last two dims unchanged modulo grouping), and
    # the axis-0 sum lowers to pure VPU vector adds (no XLU reduce per step).
    acc_ref[...] += jnp.sum(sq.reshape(tile_rows // 8, 8, width), axis=0)

    @pl.when(s == pl.num_programs(1) - 1)
    def _finalize():
        out_ref[...] = acc_ref[...].reshape(1, 8, width)


def image_level_loss(y_true: jax.Array, y_pred: jax.Array) -> jax.Array:
    """Mean squared error over (B, H, W, C) float32 images. Returns scalar f32."""
    assert y_true.shape == y_pred.shape
    B, H, W, C = y_true.shape
    total = B * H * W * C
    width = _LANES

    # Row bookkeeping: steps first, then smallest 8-aligned tile covering them,
    # so zero-padding stays small even when the size is just over a tile.
    rows_needed = _ceil_div(total, width)
    rows_per_part = _ceil_div(rows_needed, _NUM_PARTS)
    steps = _ceil_div(rows_per_part, _MAX_TILE_ROWS)
    tile_rows = _round_up(_ceil_div(rows_per_part, steps), 8)
    padded_rows = _NUM_PARTS * steps * tile_rows
    padded_total = padded_rows * width

    # Lane-dense flattening + zero padding (free correctness-wise for
    # sum-of-squares: both operands are padded with the same zeros).
    yt = y_true.astype(jnp.float32).reshape(-1)
    yp = y_pred.astype(jnp.float32).reshape(-1)
    pad = padded_total - total
    if pad:
        yt = jnp.pad(yt, (0, pad))
        yp = jnp.pad(yp, (0, pad))
    yt = yt.reshape(padded_rows, width)
    yp = yp.reshape(padded_rows, width)

    kernel = functools.partial(
        _image_level_mse_kernel, tile_rows=tile_rows, width=width
    )

    # 2 inputs x 2 pipeline buffers x tile + small accumulator/output; bounded
    # explicitly so the footprint is safe on v7x (64 MiB physical VMEM).
    tile_bytes = tile_rows * width * 4
    vmem_limit = min(48 * 1024 * 1024, max(16 * 1024 * 1024, 5 * tile_bytes))

    partials = pl.pallas_call(
        kernel,
        out_shape=jax.ShapeDtypeStruct((_NUM_PARTS, 8, width), jnp.float32),
        grid_spec=pltpu.PrefetchScalarGridSpec(
            num_scalar_prefetch=0,
            grid=(_NUM_PARTS, steps),
            in_specs=[
                pl.BlockSpec((tile_rows, width), lambda p, s: (p * steps + s, 0)),
                pl.BlockSpec((tile_rows, width), lambda p, s: (p * steps + s, 0)),
            ],
            out_specs=pl.BlockSpec((1, 8, width), lambda p, s: (p, 0, 0)),
            scratch_shapes=[pltpu.VMEM((8, width), jnp.float32)],
        ),
        compiler_params=pltpu.CompilerParams(
            dimension_semantics=("parallel", "arbitrary"),
            vmem_limit_bytes=vmem_limit,
        ),
    )(yt, yp)

    # Tiny final cross-lane reduction + 1/N normalization in the wrapper.
    return jnp.sum(partials) * jnp.float32(1.0 / float(total))


if __name__ == "__main__":
    key = jax.random.PRNGKey(0)
    k1, k2 = jax.random.split(key)

    B, H, W, C = 2, 16, 16, 4
    y_true = jax.random.normal(k1, (B, H, W, C), dtype=jnp.float32)
    y_pred = jax.random.normal(k2, (B, H, W, C), dtype=jnp.float32)

    loss = image_level_loss(y_true, y_pred)
    jax.block_until_ready(loss)

    # reference check against plain JAX
    ref = jnp.mean((y_true - y_pred) ** 2)
    assert jnp.allclose(loss, ref, rtol=1e-5, atol=1e-6), (loss, ref)

    # second check with a ragged (non-lane-aligned) shape to exercise padding
    k3, k4 = jax.random.split(k2)
    y_true2 = jax.random.normal(k3, (2, 15, 17, 3), dtype=jnp.float32)
    y_pred2 = jax.random.normal(k4, (2, 15, 17, 3), dtype=jnp.float32)
    loss2 = image_level_loss(y_true2, y_pred2)
    jax.block_until_ready(loss2)
    ref2 = jnp.mean((y_true2 - y_pred2) ** 2)
    assert jnp.allclose(loss2, ref2, rtol=1e-5, atol=1e-6), (loss2, ref2)

    print("KERNEL_OK")
</pallas_src>

<mosaic_0001>
module attributes {stable_mosaic.version = 11 : i64} {
  func.func @_image_level_mse_kernel(%arg0: i32, %arg1: i32, %arg2: memref<8x1024xf32, #tpu.memory_space<vmem>>, %arg3: memref<8x1024xf32, #tpu.memory_space<vmem>>, %arg4: memref<1x8x1024xf32, #tpu.memory_space<vmem>>, %arg5: memref<8x1024xf32, #tpu.memory_space<vmem>>) attributes {dimension_semantics = [#tpu.dimension_semantics<parallel>, #tpu.dimension_semantics<arbitrary>], iteration_bounds = array<i64: 2, 1>, scalar_prefetch = 0 : i64, scratch_operands = 1 : i64, tpu.core_type = #tpu.core_type<tc>, window_params = [{transform_indices = @transform_0, window_bounds = array<i64: 8, 1024>}, {transform_indices = @transform_1, window_bounds = array<i64: 8, 1024>}, {transform_indices = @transform_2, window_bounds = array<i64: 1, 8, 1024>}]} {
    %c0_i32 = arith.constant 0 : i32
    %0 = arith.cmpi eq, %arg1, %c0_i32 : i32
    %1 = arith.extui %0 : i1 to i32
    %c0_i32_0 = arith.constant 0 : i32
    %2 = arith.cmpi ne, %1, %c0_i32_0 : i32
    scf.if %2 {
      %cst_10 = arith.constant 0.000000e+00 : f32
      %15 = vector.broadcast %cst_10 : f32 to vector<8x1024xf32>
      %c0_11 = arith.constant 0 : index
      %c0_12 = arith.constant 0 : index
      %16 = vector.load %arg5[%c0_11, %c0_12] : memref<8x1024xf32, #tpu.memory_space<vmem>>, vector<8x1024xf32>
      tpu.vector_store %arg5[%c0_11, %c0_12], %15 {strides = array<i32>} : memref<8x1024xf32, #tpu.memory_space<vmem>>, vector<8x1024xf32>,
    } else {
    }
    %c0 = arith.constant 0 : index
    %c0_1 = arith.constant 0 : index
    %3 = vector.load %arg2[%c0, %c0_1] : memref<8x1024xf32, #tpu.memory_space<vmem>>, vector<8x1024xf32>
    %c0_2 = arith.constant 0 : index
    %c0_3 = arith.constant 0 : index
    %4 = vector.load %arg3[%c0_2, %c0_3] : memref<8x1024xf32, #tpu.memory_space<vmem>>, vector<8x1024xf32>
    %5 = arith.subf %3, %4 : vector<8x1024xf32>
    %6 = arith.mulf %5, %5 : vector<8x1024xf32>
    %c0_4 = arith.constant 0 : index
    %c0_5 = arith.constant 0 : index
    %7 = vector.load %arg5[%c0_4, %c0_5] : memref<8x1024xf32, #tpu.memory_space<vmem>>, vector<8x1024xf32>
    %8 = vector.shape_cast %6 : vector<8x1024xf32> to vector<1x8x1024xf32>
    %cst = arith.constant dense<0.000000e+00> : vector<8x1024xf32>
    %9 = vector.multi_reduction <add>, %8, %cst [0] : vector<1x8x1024xf32> to vector<8x1024xf32>
    %10 = arith.addf %7, %9 : vector<8x1024xf32>
    %c0_6 = arith.constant 0 : index
    %c0_7 = arith.constant 0 : index
    %11 = vector.load %arg5[%c0_6, %c0_7] : memref<8x1024xf32, #tpu.memory_space<vmem>>, vector<8x1024xf32>
    tpu.vector_store %arg5[%c0_6, %c0_7], %10 {strides = array<i32>} : memref<8x1024xf32, #tpu.memory_space<vmem>>, vector<8x1024xf32>,
    %c0_i32_8 = arith.constant 0 : i32
    %12 = arith.cmpi eq, %arg1, %c0_i32_8 : i32
    %13 = arith.extui %12 : i1 to i32
    %c0_i32_9 = arith.constant 0 : i32
    %14 = arith.cmpi ne, %13, %c0_i32_9 : i32
    scf.if %14 {
      %c0_10 = arith.constant 0 : index
      %c0_11 = arith.constant 0 : index
      %15 = vector.load %arg5[%c0_10, %c0_11] : memref<8x1024xf32, #tpu.memory_space<vmem>>, vector<8x1024xf32>
      %16 = vector.shape_cast %15 : vector<8x1024xf32> to vector<1x8x1024xf32>
      %c0_12 = arith.constant 0 : index
      %c0_13 = arith.constant 0 : index
      %c0_14 = arith.constant 0 : index
      %17 = vector.load %arg4[%c0_12, %c0_13, %c0_14] : memref<1x8x1024xf32, #tpu.memory_space<vmem>>, vector<1x8x1024xf32>
      tpu.vector_store %arg4[%c0_12, %c0_13, %c0_14], %16 {strides = array<i32>} : memref<1x8x1024xf32, #tpu.memory_space<vmem>>, vector<1x8x1024xf32>,
    } else {
    }
    return
  }
  func.func @transform_0(%arg0: i32, %arg1: i32) -> (i32, i32) {
    %c1_i32 = arith.constant 1 : i32
    %0 = arith.muli %arg0, %c1_i32 : i32
    %1 = arith.addi %0, %arg1 : i32
    %c0_i32 = arith.constant 0 : i32
    %c0_i32_0 = arith.constant 0 : i32
    return %1, %c0_i32 : i32, i32
  }
  func.func @transform_1(%arg0: i32, %arg1: i32) -> (i32, i32) {
    %c1_i32 = arith.constant 1 : i32
    %0 = arith.muli %arg0, %c1_i32 : i32
    %1 = arith.addi %0, %arg1 : i32
    %c0_i32 = arith.constant 0 : i32
    %c0_i32_0 = arith.constant 0 : i32
    return %1, %c0_i32 : i32, i32
  }
  func.func @transform_2(%arg0: i32, %arg1: i32) -> (i32, i32, i32) {
    %c0_i32 = arith.constant 0 : i32
    %c0_i32_0 = arith.constant 0 : i32
    %c0_i32_1 = arith.constant 0 : i32
    return %arg0, %c0_i32, %c0_i32_0 : i32, i32, i32
  }
}

</mosaic_0001>

<llo_original>
// kernel: tpu_custom_call.1
$region0: #{tpu_custom_call.1}
  #allocation0 [shape = 'u32[]', space=smem, size = 0x4, offset = 0x4, fixed_abs, tag = 'smem constant byte address 0x4 - core index']
  #allocation1 [shape = 'u32[144,128]{1,0:T(1,128)}', space=vmem, size = 0x12000, scoped, tag = 'internal scratch']
  #allocation2 [shape = 'f32[8,1024]{1,0:T(8,128)}', space=vmem, size = 0x8000, scoped, tag = 'scratch operand']
  %s0 = inlined_call_operand.hbm [shape: f32[16,1024], index: 0, kind: input, shape index: {}]
  %s1 = inlined_call_operand.hbm [shape: f32[16,1024], index: 1, kind: input, shape index: {}]
  %s2 = inlined_call_operand.hbm [shape: f32[2,8,1024], index: 2, kind: output, shape index: {}]
  %s3 = sld [smem:[#allocation0]]
  $region57: #{tpu_custom_call.1} parent=0
    _
  %s5 = ssub.s32 1, %s3
  %s6 = scalar_select 0, %s5, %s3
  $region1: #{tpu_custom_call.1} parent=0
    #allocation3 [shape = 'u8[65536]{0}', space=vmem, size = 0x10000, scoped, tag = 'input window, operand 0']
    #allocation4 [shape = 's32[2]{0}', space=sflag, size = 0x8, scoped, tag = 'scoped memory for tpu_custom_call.1']
    #allocation5 [shape = 's32[2]{0}', space=sflag, size = 0x8, scoped, tag = 'scoped memory for tpu_custom_call.1']
    #allocation6 [shape = 'u8[65536]{0}', space=vmem, size = 0x10000, scoped, tag = 'input window, operand 1']
    #allocation7 [shape = 's32[2]{0}', space=sflag, size = 0x8, scoped, tag = 'scoped memory for tpu_custom_call.1']
    #allocation8 [shape = 'u8[65536]{0}', space=vmem, size = 0x10000, scoped, tag = 'output window, operand 0']
    %7 = vsyncpa [#allocation4], 0
    %s8 = scalar_lea.sflag [#allocation4], 1
    %9 = vsyncpa %s8, 0
    %10 = vsyncpa [#allocation7], 0
    %s11 = scalar_lea.sflag [#allocation7], 1
    %12 = vsyncpa %s11, 0
    %13 = vsyncpa [#allocation5], 0
    %s14 = scalar_lea.sflag [#allocation5], 1
    %15 = vsyncpa %s14, 0
    loop: start=0, step=1, limit=4
    $region2: #{tpu_custom_call.1} parent=1 // loop_pre_header
      _
    $region3: #{tpu_custom_call.1} parent=1 // loop_header
      %s17 = sphi 0, %s21
      %p18 = scmp.ge.s32.totalorder %s17, 4
      %s24 = sphi 0, %s36
      %s25 = sphi 0, %s32
      %s26 = sphi 0, %s24
      %s27 = sphi 0, %s25
      %s28 = sphi 0, %s26
      %s29 = sphi 0, %s27
      %s41 = sphi 0, %s43
      %s44 = sphi 0, %s41
      %s45 = sphi 0, %s44
      %s61 = sphi 0, %s45
      %s69 = sphi 0, %s71
      %s72 = sphi 0, %s69
      %s73 = sphi 0, %s72
      %s89 = sphi 0, %s73
      %s95 = sphi 0, %s97
      %s98 = sphi 0, %s95
      %s99 = sphi 0, %s98
      %s115 = sphi 0, %s99
    $region4: #{tpu_custom_call.1} parent=1 // loop_header_branch
      %20 = sbr.rel (%p18) target = $region8
    $region5: #{tpu_custom_call.1} parent=1 // loop_body
      %s22 = ssub.s32 %s17, 1
      %s23 = ssub.s32 %s17, 2
      %s30 = sadd.s32 1, %s25
      %p31 = scmp.ge.s32.totalorder %s30, 1
      %s32 = scalar_select %p31, 0, %s30
      %s33 = sadd.s32 1, %s24
      %s34 = scalar_select %p31, %s33, %s24
      %p35 = scmp.ge.s32.totalorder %s34, 2
      %s36 = scalar_select %p35, 0, %s34
      %s37 = sadd.s32 %s24, %s25
      %s38 = sadd.s32 %s36, %s32
      %s39 = ssub.s32 %s37, %s38
      %p40 = scmp.eq.s32.totalorder %s39, 0
      %s42 = sadd.s32 %s41, 1
      %s43 = scalar_select %p40, %s41, %s42
      %p46 = pneg %p40
      %p47 = scmp.eq.s32.totalorder %s17, 1
      %p48 = por %p46, %p47
      %p49 = scmp.ne.s32.totalorder %s41, %s44
      %p50 = scmp.eq.s32.totalorder %s17, 0
      %p51 = por %p49, %p50
      %p52 = scmp.ne.s32.totalorder %s41, %s44
      %p53 = scmp.eq.s32.totalorder %s22, 1
      %p54 = por %p52, %p53
      %p55 = scmp.ne.s32.totalorder %s44, %s45
      %p56 = scmp.eq.s32.totalorder %s22, 0
      %p57 = por %p55, %p56
      %p58 = scmp.ne.s32.totalorder %s44, %s45
      %p59 = scmp.eq.s32.totalorder %s23, 1
      %p60 = por %p58, %p59
      %p62 = scmp.ne.s32.totalorder %s45, %s61
      %p63 = scmp.eq.s32.totalorder %s23, 0
      %p64 = por %p62, %p63
      %s65 = sadd.s32 %s24, %s25
      %s66 = sadd.s32 %s36, %s32
      %s67 = ssub.s32 %s65, %s66
      %p68 = scmp.eq.s32.totalorder %s67, 0
      %s70 = sadd.s32 %s69, 1
      %s71 = scalar_select %p68, %s69, %s70
      %p74 = pneg %p68
      %p75 = scmp.eq.s32.totalorder %s17, 1
      %p76 = por %p74, %p75
      %p77 = scmp.ne.s32.totalorder %s69, %s72
      %p78 = scmp.eq.s32.totalorder %s17, 0
      %p79 = por %p77, %p78
      %p80 = scmp.ne.s32.totalorder %s69, %s72
      %p81 = scmp.eq.s32.totalorder %s22, 1
      %p82 = por %p80, %p81
      %p83 = scmp.ne.s32.totalorder %s72, %s73
      %p84 = scmp.eq.s32.totalorder %s22, 0
      %p85 = por %p83, %p84
      %p86 = scmp.ne.s32.totalorder %s72, %s73
      %p87 = scmp.eq.s32.totalorder %s23, 1
      %p88 = por %p86, %p87
      %p90 = scmp.ne.s32.totalorder %s73, %s89
      %p91 = scmp.eq.s32.totalorder %s23, 0
      %p92 = por %p90, %p91
      %s93 = ssub.s32 %s24, %s36
      %p94 = scmp.eq.s32.totalorder %s93, 0
      %s96 = sadd.s32 %s95, 1
      %s97 = scalar_select %p94, %s95, %s96
      %p100 = pneg %p94
      %p101 = scmp.eq.s32.totalorder %s17, 1
      %p102 = por %p100, %p101
      %p103 = scmp.ne.s32.totalorder %s95, %s98
      %p104 = scmp.eq.s32.totalorder %s17, 0
      %p105 = por %p103, %p104
      %p106 = scmp.ne.s32.totalorder %s95, %s98
      %p107 = scmp.eq.s32.totalorder %s22, 1
      %p108 = por %p106, %p107
      %p109 = scmp.ne.s32.totalorder %s98, %s99
      %p110 = scmp.eq.s32.totalorder %s22, 0
      %p111 = por %p109, %p110
      %p112 = scmp.ne.s32.totalorder %s98, %s99
      %p113 = scmp.eq.s32.totalorder %s23, 1
      %p114 = por %p112, %p113
      %p116 = scmp.ne.s32.totalorder %s99, %s115
      %p117 = scmp.eq.s32.totalorder %s23, 0
      %p118 = por %p116, %p117
      %p119 = scmp.le.s32.totalorder 1, %s17
      %p120 = scmp.lt.s32.totalorder %s17, 3
      %p121 = pnand %p119, %p120
      %p122 = pneg %p121
      // Predicated region
      $region9: #{tpu_custom_call.1} parent=5 // pred_check
        _
      $region10: #{tpu_custom_call.1} parent=5 // pred_check_branch
        %124 = sbr.rel (%p121) target = $region12
      $region11: #{tpu_custom_call.1} parent=5 // pred_region
        %s125 = ssub.s32 %s17, 1
      $region12: #{tpu_custom_call.1} parent=5 // pred_fallthru
        _
      %p126 = scmp.lt.s32.totalorder %s17, 2
      // Predicated region
      $region13: #{tpu_custom_call.1} parent=5 // pred_check
        %p127 = pneg %p126
      $region14: #{tpu_custom_call.1} parent=5 // pred_check_branch
        %129 = sbr.rel (%p127) target = $region16
      $region15: #{tpu_custom_call.1} parent=5 // pred_region
        // Predicated region
        $region17: #{tpu_custom_call.1} parent=15 // pred_check
          %p130 = pneg %p51
        $region18: #{tpu_custom_call.1} parent=15 // pred_check_branch
          %132 = sbr.rel (%p130) target = $region20
        $region19: #{tpu_custom_call.1} parent=15 // pred_region
          %s133 = sand.u32 %s41, 1
          %s134 = scalar_lea.sflag [#allocation4], %s133
          %s135 = sand.u32 %s41, 1
          %s136 = smul.addr %s135, 64
          %s137 = scalar_lea.vmem [#allocation3], %s136
          %s138 = sadd.s32 %s24, %s25
          %s140 = ssub.s32 1024, 1024
          %141 = vsyncadd %s134, %s140
          %s142 = smul.addr %s138, 8
          %s143 = smul.addr %s142, 128
          %s144 = scalar_lea.hbm %s0, %s143
          %s146 = sshll.u32 %s137, 4
          %s147 = int_to_ptr.vmem [resolvable:$true] %s146
          %149 = dma.hbm_to_vmem [thread:$0]  %s144, 1024, %s147, %s134
        $region20: #{tpu_custom_call.1} parent=15 // pred_fallthru
          _
        // Predicated region
        $region21: #{tpu_custom_call.1} parent=15 // pred_check
          %p150 = pneg %p79
        $region22: #{tpu_custom_call.1} parent=15 // pred_check_branch
          %152 = sbr.rel (%p150) target = $region24
        $region23: #{tpu_custom_call.1} parent=15 // pred_region
          %s153 = sand.u32 %s69, 1
          %s154 = scalar_lea.sflag [#allocation7], %s153
          %s155 = sand.u32 %s69, 1
          %s156 = smul.addr %s155, 64
          %s157 = scalar_lea.vmem [#allocation6], %s156
          %s158 = sadd.s32 %s24, %s25
          %s160 = ssub.s32 1024, 1024
          %161 = vsyncadd %s154, %s160
          %s162 = smul.addr %s158, 8
          %s163 = smul.addr %s162, 128
          %s164 = scalar_lea.hbm %s1, %s163
          %s166 = sshll.u32 %s157, 4
          %s167 = int_to_ptr.vmem [resolvable:$true] %s166
          %169 = dma.hbm_to_vmem [thread:$0]  %s164, 1024, %s167, %s154
        $region24: #{tpu_custom_call.1} parent=15 // pred_fallthru
          _
      $region16: #{tpu_custom_call.1} parent=5 // pred_fallthru
        _
      %p170 = scmp.le.s32.totalorder 1, %s17
      %p171 = scmp.lt.s32.totalorder %s17, 3
      %p172 = pnand %p170, %p171
      %p173 = pneg %p172
      // Predicated region
      $region25: #{tpu_custom_call.1} parent=5 // pred_check
        _
      $region26: #{tpu_custom_call.1} parent=5 // pred_check_branch
        %175 = sbr.rel (%p172) target = $region28
      $region27: #{tpu_custom_call.1} parent=5 // pred_region
        %s176 = ssub.s32 %s17, 1
        %s177 = sand.u32 %s44, 1
        %s178 = scalar_lea.sflag [#allocation4], %s177
        %s179 = sand.u32 %s44, 1
        %s180 = smul.addr %s179, 64
        %s181 = scalar_lea.vmem [#allocation3], %s180
        // Predicated region
        $region29: #{tpu_custom_call.1} parent=27 // pred_check
          %p182 = pneg %p57
        $region30: #{tpu_custom_call.1} parent=27 // pred_check_branch
          %184 = sbr.rel (%p182) target = $region32
        $region31: #{tpu_custom_call.1} parent=27 // pred_region
          %185 = dma.done %s178, 1024
        $region32: #{tpu_custom_call.1} parent=27 // pred_fallthru
          _
        %s186 = sand.u32 %s72, 1
        %s187 = scalar_lea.sflag [#allocation7], %s186
        %s188 = sand.u32 %s72, 1
        %s189 = smul.addr %s188, 64
        %s190 = scalar_lea.vmem [#allocation6], %s189
        // Predicated region
        $region33: #{tpu_custom_call.1} parent=27 // pred_check
          %p191 = pneg %p85
        $region34: #{tpu_custom_call.1} parent=27 // pred_check_branch
          %193 = sbr.rel (%p191) target = $region36
        $region35: #{tpu_custom_call.1} parent=27 // pred_region
          %194 = dma.done %s187, 1024
        $region36: #{tpu_custom_call.1} parent=27 // pred_fallthru
          _
        %s195 = sand.u32 %s44, 1
        %s196 = scalar_lea.sflag [#allocation4], %s195
        %s197 = sand.u32 %s44, 1
        %s198 = smul.addr %s197, 64
        %s199 = scalar_lea.vmem [#allocation3], %s198
        %p200 = pneg %p57
        %p201 = pneg %p54
        %s202 = sand.u32 %s72, 1
        %s203 = scalar_lea.sflag [#allocation7], %s202
        %s204 = sand.u32 %s72, 1
        %s205 = smul.addr %s204, 64
        %s206 = scalar_lea.vmem [#allocation6], %s205
        %p207 = pneg %p85
        %p208 = pneg %p82
        %p209 = pneg %p111
        %p210 = pneg %p108
        %s211 = sand.u32 %s98, 1
        %s212 = scalar_lea.sflag [#allocation5], %s211
        %s213 = sand.u32 %s98, 1
        %s214 = smul.addr %s213, 64
        %s215 = scalar_lea.vmem [#allocation8], %s214
        %s216 = sadd.s32 %s26, %s27
        %s217 = sadd.s32 %s26, %s27
        %p218 = scmp.eq.s32.totalorder %s27, 0
        // Predicated region
        $region37: #{tpu_custom_call.1} parent=27 // pred_check
          %p219 = pneg %p218
        $region38: #{tpu_custom_call.1} parent=27 // pred_check_branch
          %221 = sbr.rel (%p219) target = $region40
        $region39: #{tpu_custom_call.1} parent=27 // pred_region
          %222 = vst [vmem:[#allocation2] sm:$0xff] 0.0
          %223 = vst [vmem:[#allocation2 + $0x8] sm:$0xff] 0.0
          %224 = vst [vmem:[#allocation2 + $0x10] sm:$0xff] 0.0
          %225 = vst [vmem:[#allocation2 + $0x18] sm:$0xff] 0.0
          %226 = vst [vmem:[#allocation2 + $0x20] sm:$0xff] 0.0
          %227 = vst [vmem:[#allocation2 + $0x28] sm:$0xff] 0.0
          %228 = vst [vmem:[#allocation2 + $0x30] sm:$0xff] 0.0
          %229 = vst [vmem:[#allocation2 + $0x38] sm:$0xff] 0.0
        $region40: #{tpu_custom_call.1} parent=27 // pred_fallthru
          _
        %v230 = vld [vmem:[%s181] sm:$0xff]
        %v231 = vld [vmem:[%s181 + $0x8] sm:$0xff]
        %v232 = vld [vmem:[%s181 + $0x10] sm:$0xff]
        %v233 = vld [vmem:[%s181 + $0x18] sm:$0xff]
        %v234 = vld [vmem:[%s181 + $0x20] sm:$0xff]
        %v235 = vld [vmem:[%s181 + $0x28] sm:$0xff]
        %v236 = vld [vmem:[%s181 + $0x30] sm:$0xff]
        %v237 = vld [vmem:[%s181 + $0x38] sm:$0xff]
        %v238 = vld [vmem:[%s190] sm:$0xff]
        %v239 = vld [vmem:[%s190 + $0x8] sm:$0xff]
        %v240 = vld [vmem:[%s190 + $0x10] sm:$0xff]
        %v241 = vld [vmem:[%s190 + $0x18] sm:$0xff]
        %v242 = vld [vmem:[%s190 + $0x20] sm:$0xff]
        %v243 = vld [vmem:[%s190 + $0x28] sm:$0xff]
        %v244 = vld [vmem:[%s190 + $0x30] sm:$0xff]
        %v245 = vld [vmem:[%s190 + $0x38] sm:$0xff]
        %v246 = vsub.f32 %v230, %v238
        %v247 = vsub.f32 %v231, %v239
        %v248 = vsub.f32 %v232, %v240
        %v249 = vsub.f32 %v233, %v241
        %v250 = vsub.f32 %v234, %v242
        %v251 = vsub.f32 %v235, %v243
        %v252 = vsub.f32 %v236, %v244
        %v253 = vsub.f32 %v237, %v245
        %v254 = vmul.f32 %v246, %v246
        %v255 = vmul.f32 %v247, %v247
        %v256 = vmul.f32 %v248, %v248
        %v257 = vmul.f32 %v249, %v249
        %v258 = vmul.f32 %v250, %v250
        %v259 = vmul.f32 %v251, %v251
        %v260 = vmul.f32 %v252, %v252
        %v261 = vmul.f32 %v253, %v253
        %v262 = vld [vmem:[#allocation2] sm:$0xff]
        %v263 = vld [vmem:[#allocation2 + $0x8] sm:$0xff]
        %v264 = vld [vmem:[#allocation2 + $0x10] sm:$0xff]
        %v265 = vld [vmem:[#allocation2 + $0x18] sm:$0xff]
        %v266 = vld [vmem:[#allocation2 + $0x20] sm:$0xff]
        %v267 = vld [vmem:[#allocation2 + $0x28] sm:$0xff]
        %v268 = vld [vmem:[#allocation2 + $0x30] sm:$0xff]
        %v269 = vld [vmem:[#allocation2 + $0x38] sm:$0xff]
        %v270 = vadd.f32 %v254, 0.0
        %v271 = vadd.f32 %v255, 0.0
        %v272 = vadd.f32 %v256, 0.0
        %v273 = vadd.f32 %v257, 0.0
        %v274 = vadd.f32 %v258, 0.0
        %v275 = vadd.f32 %v259, 0.0
        %v276 = vadd.f32 %v260, 0.0
        %v277 = vadd.f32 %v261, 0.0
        %v278 = vadd.f32 %v262, %v270
        %v279 = vadd.f32 %v263, %v271
        %v280 = vadd.f32 %v264, %v272
        %v281 = vadd.f32 %v265, %v273
        %v282 = vadd.f32 %v266, %v274
        %v283 = vadd.f32 %v267, %v275
        %v284 = vadd.f32 %v268, %v276
        %v285 = vadd.f32 %v269, %v277
        %286 = vst [vmem:[#allocation2] sm:$0xff] %v278
        %287 = vst [vmem:[#allocation2 + $0x8] sm:$0xff] %v279
        %288 = vst [vmem:[#allocation2 + $0x10] sm:$0xff] %v280
        %289 = vst [vmem:[#allocation2 + $0x18] sm:$0xff] %v281
        %290 = vst [vmem:[#allocation2 + $0x20] sm:$0xff] %v282
        %291 = vst [vmem:[#allocation2 + $0x28] sm:$0xff] %v283
        %292 = vst [vmem:[#allocation2 + $0x30] sm:$0xff] %v284
        %293 = vst [vmem:[#allocation2 + $0x38] sm:$0xff] %v285
        // Predicated region
        $region41: #{tpu_custom_call.1} parent=27 // pred_check
          %p294 = pneg %p218
        $region42: #{tpu_custom_call.1} parent=27 // pred_check_branch
          %296 = sbr.rel (%p294) target = $region44
        $region43: #{tpu_custom_call.1} parent=27 // pred_region
          %v297 = vld [vmem:[#allocation2] sm:$0xff]
          %v298 = vld [vmem:[#allocation2 + $0x8] sm:$0xff]
          %v299 = vld [vmem:[#allocation2 + $0x10] sm:$0xff]
          %v300 = vld [vmem:[#allocation2 + $0x18] sm:$0xff]
          %v301 = vld [vmem:[#allocation2 + $0x20] sm:$0xff]
          %v302 = vld [vmem:[#allocation2 + $0x28] sm:$0xff]
          %v303 = vld [vmem:[#allocation2 + $0x30] sm:$0xff]
          %v304 = vld [vmem:[#allocation2 + $0x38] sm:$0xff]
          %305 = vst [vmem:[%s215] sm:$0xff] %v297
          %306 = vst [vmem:[%s215 + $0x8] sm:$0xff] %v298
          %307 = vst [vmem:[%s215 + $0x10] sm:$0xff] %v299
          %308 = vst [vmem:[%s215 + $0x18] sm:$0xff] %v300
          %309 = vst [vmem:[%s215 + $0x20] sm:$0xff] %v301
          %310 = vst [vmem:[%s215 + $0x28] sm:$0xff] %v302
          %311 = vst [vmem:[%s215 + $0x30] sm:$0xff] %v303
          %312 = vst [vmem:[%s215 + $0x38] sm:$0xff] %v304
        $region44: #{tpu_custom_call.1} parent=27 // pred_fallthru
          _
        %s313 = sand.u32 %s98, 1
        %s314 = scalar_lea.sflag [#allocation5], %s313
        %s315 = sand.u32 %s98, 1
        %s316 = smul.addr %s315, 64
        %s317 = scalar_lea.vmem [#allocation8], %s316
        // Predicated region
        $region45: #{tpu_custom_call.1} parent=27 // pred_check
          %p318 = pneg %p108
        $region46: #{tpu_custom_call.1} parent=27 // pred_check_branch
          %320 = sbr.rel (%p318) target = $region48
        $region47: #{tpu_custom_call.1} parent=27 // pred_region
          %s322 = ssub.s32 1024, 1024
          %323 = vsyncadd %s314, %s322
          %s324 = smul.addr %s26, 8
          %s325 = smul.addr %s324, 128
          %s326 = scalar_lea.hbm %s2, %s325
          %s328 = sshll.u32 %s317, 4
          %s329 = int_to_ptr.vmem [resolvable:$true] %s328
          %331 = dma.vmem_to_hbm [thread:$0]  %s329, 1024, %s326, %s314
        $region48: #{tpu_custom_call.1} parent=27 // pred_fallthru
          _
      $region28: #{tpu_custom_call.1} parent=5 // pred_fallthru
        _
      %p332 = scmp.le.s32.totalorder 2, %s17
      // Predicated region
      $region49: #{tpu_custom_call.1} parent=5 // pred_check
        %p333 = pneg %p332
      $region50: #{tpu_custom_call.1} parent=5 // pred_check_branch
        %335 = sbr.rel (%p333) target = $region52
      $region51: #{tpu_custom_call.1} parent=5 // pred_region
        %s336 = ssub.s32 %s17, 2
        // Predicated region
        $region53: #{tpu_custom_call.1} parent=51 // pred_check
          %p337 = pneg %p114
        $region54: #{tpu_custom_call.1} parent=51 // pred_check_branch
          %339 = sbr.rel (%p337) target = $region56
        $region55: #{tpu_custom_call.1} parent=51 // pred_region
          %s340 = sand.u32 %s99, 1
          %s341 = scalar_lea.sflag [#allocation5], %s340
          %s342 = sand.u32 %s99, 1
          %s343 = smul.addr %s342, 64
          %s344 = scalar_lea.vmem [#allocation8], %s343
          %345 = dma.done %s341, 1024
        $region56: #{tpu_custom_call.1} parent=51 // pred_fallthru
          _
      $region52: #{tpu_custom_call.1} parent=5 // pred_fallthru
        _
    $region6: #{tpu_custom_call.1} parent=1 // loop_footer
      %s21 = sadd.s32 1, %s17
    $region7: #{tpu_custom_call.1} parent=1 // loop_footer_branch
      %16 = sbr.rel target = $region3
    $region8: #{tpu_custom_call.1} parent=1 // loop_exit
      _
    %346 = vsyncpa [#allocation4], 1
    %s347 = scalar_lea.sflag [#allocation4], 1
    %348 = vsyncpa %s347, 1
    %349 = vsyncpa [#allocation7], 1
    %s350 = scalar_lea.sflag [#allocation7], 1
    %351 = vsyncpa %s350, 1
    %352 = vsyncpa [#allocation5], 1
    %s353 = scalar_lea.sflag [#allocation5], 1
    %354 = vsyncpa %s353, 1

</llo_original>
